<compile_context>
chip_gen: v7x
topology: tpu7x:2x2x1
jax: 0.10.0
libtpu: 0.0.40
codegen_flags: <defaults>
</compile_context>

<pallas_src>
import math

import jax
import jax.numpy as jnp
from jax.experimental import pallas as pl

BN_EPS = 1e-5
LANE = 128


def _round_up(n, m):
    return ((n + m - 1) // m) * m


def _full_spec(shape):
    # Whole-array block (always legal: block_shape == array shape).
    return pl.BlockSpec(shape, lambda: (0,) * len(shape))


# ---------------------------------------------------------------------------
# Fused kernel
# ---------------------------------------------------------------------------
def _make_fused_mlp_kernel(n_hidden, batch, dout_pads):
    inv_b = 1.0 / float(batch)

    def kernel(*refs):
        # refs = (x, w0, ..., w_{L-1}, w_final, affine, out)
        x_ref = refs[0]
        w_refs = refs[1:1 + n_hidden + 1]
        aff_ref = refs[1 + n_hidden + 1]
        o_ref = refs[-1]

        aff = aff_ref[...]             # (2*n_hidden + 1, Dmax_pad) f32
        xb = x_ref[...]                # (B, K0_pad) bf16, lane-dense

        for i in range(n_hidden):
            d = dout_pads[i]
            w = w_refs[i][...]         # (Kin_pad, d) bf16 pre-transposed weight
            # MXU: bf16 operands, f32 accumulation.
            y = jnp.dot(xb, w, preferred_element_type=jnp.float32)   # (B, d) f32
            # BatchNorm1d (train mode): one-pass sum / sum-of-squares stats.
            s1 = jnp.sum(y, axis=0, keepdims=True)
            s2 = jnp.sum(y * y, axis=0, keepdims=True)
            mean = s1 * inv_b
            var = jnp.maximum(s2 * inv_b - mean * mean, 0.0)  # guard cancellation
            gamma = aff[2 * i:2 * i + 1, :d]
            beta = aff[2 * i + 1:2 * i + 2, :d]
            # Fold BN affine into (1, d) scale/shift; padded cols stay exactly 0.
            scale = gamma * jax.lax.rsqrt(var + BN_EPS)
            shift = beta - mean * scale
            xb = jnp.maximum(y * scale + shift, 0.0).astype(jnp.bfloat16)

        wf = w_refs[n_hidden][...]                         # final weight, bf16
        df = dout_pads[n_hidden]
        bf = aff[2 * n_hidden:2 * n_hidden + 1, :df]       # final bias (1, df) f32
        o_ref[...] = (
            jnp.dot(xb, wf, preferred_element_type=jnp.float32) + bf
        ).astype(o_ref.dtype)

    return kernel


# ---------------------------------------------------------------------------
# Wrapper
# ---------------------------------------------------------------------------
def mlp_bn_forward(x_pad_bf16, weights, affine, dout_pads):
    """x_pad_bf16: (B, K0_pad) bf16; weights: list of bf16 padded (Kin, Dout);
    affine: (2*n_hidden+1, Dmax_pad) f32. Returns lane-padded (B, Dlast_pad) f32."""
    B = x_pad_bf16.shape[0]
    n_hidden = len(weights) - 1

    flat_args = [x_pad_bf16] + list(weights) + [affine]
    in_specs = [_full_spec(t.shape) for t in flat_args]
    d_out_pad = dout_pads[-1]

    return pl.pallas_call(
        _make_fused_mlp_kernel(n_hidden, B, dout_pads),
        out_shape=jax.ShapeDtypeStruct((B, d_out_pad), jnp.float32),
        in_specs=in_specs,
        out_specs=_full_spec((B, d_out_pad)),
    )(*flat_args)


# ---------------------------------------------------------------------------
# Parameter init (matches torch: xavier_uniform weights, zero bias,
# BatchNorm1d gamma=1, beta=0). True (unpadded) sizes, weights stored (din, dout).
# ---------------------------------------------------------------------------
def init_params(key, sizes):
    params = []
    for din, dout in zip(sizes[:-1], sizes[1:]):
        key, wk = jax.random.split(key)
        bound = math.sqrt(6.0 / (din + dout))  # xavier_uniform gain=1
        w = jax.random.uniform(wk, (din, dout), jnp.float32, -bound, bound)
        b = jnp.zeros((1, dout), jnp.float32)
        gamma = jnp.ones((1, dout), jnp.float32)
        beta = jnp.zeros((1, dout), jnp.float32)
        params.append((w, b, gamma, beta))
    return params


def pack_params(params, input_size):
    """Pad feature dims to multiples of 128, cast weights to bf16, and pack all
    gamma/beta rows + final bias into a single f32 array."""
    n = len(params)
    n_hidden = n - 1
    prev_pad = _round_up(input_size, LANE)  # x is lane-padded host-side
    weights, dout_pads = [], []
    for (w, _b, _g, _bt) in params:
        din_true, dout_true = w.shape
        dout_pad = _round_up(dout_true, LANE)
        w_p = (
            jnp.zeros((prev_pad, dout_pad), jnp.float32)
            .at[:din_true, :dout_true]
            .set(w)
            .astype(jnp.bfloat16)
        )
        weights.append(w_p)
        dout_pads.append(dout_pad)
        prev_pad = dout_pad

    dmax = max(dout_pads)
    # rows 2i / 2i+1: gamma / beta of hidden layer i; last row: final Linear bias.
    aff = jnp.zeros((2 * n_hidden + 1, dmax), jnp.float32)
    for i, (w, _b, gamma, beta) in enumerate(params[:-1]):
        dout_true = w.shape[1]
        aff = aff.at[2 * i, :dout_true].set(gamma[0])
        aff = aff.at[2 * i + 1, :dout_true].set(beta[0])
    w_last, b_last, _, _ = params[-1]
    aff = aff.at[2 * n_hidden, :w_last.shape[1]].set(b_last[0])
    return weights, aff, dout_pads


def pad_input(x, input_size):
    B = x.shape[0]
    k0 = _round_up(input_size, LANE)
    x_p = jnp.zeros((B, k0), jnp.float32).at[:, :input_size].set(x)
    return x_p.astype(jnp.bfloat16)


# ---------------------------------------------------------------------------
# Reference (plain JAX, true sizes). Mirrors the module's train-mode BN forward
# with the same bf16 matmul-operand precision the kernel uses.
# ---------------------------------------------------------------------------
def mlp_bn_reference(x, params):
    def bdot(a, w):
        return jnp.dot(a.astype(jnp.bfloat16), w.astype(jnp.bfloat16),
                       preferred_element_type=jnp.float32)

    h = x
    for (w, b, gamma, beta) in params[:-1]:
        y = bdot(h, w) + b
        mean = jnp.mean(y, axis=0, keepdims=True)
        var = jnp.mean((y - mean) ** 2, axis=0, keepdims=True)
        y = (y - mean) * jax.lax.rsqrt(var + BN_EPS) * gamma + beta
        h = jnp.maximum(y, 0.0)
    w, b, _, _ = params[-1]
    return bdot(h, w) + b


if __name__ == "__main__":
    # Small shapes consistent with the module: input_size=16, hidden=[32, 32], out=8.
    batch = 8          # NOTE: raise toward 128/256 per call in deployment to fill the MXU
    input_size = 16
    hidden_layers = [32, 32]
    out_size = 8
    sizes = [input_size] + hidden_layers + [out_size]

    key = jax.random.PRNGKey(0)
    key, xk = jax.random.split(key)
    x = jax.random.normal(xk, (batch, input_size), jnp.float32)

    params = init_params(key, sizes)                  # torch-equivalent true-size params
    weights, affine, dout_pads = pack_params(params, input_size)
    x_pad = pad_input(x, input_size)

    out_pad = mlp_bn_forward(x_pad, weights, affine, dout_pads)
    out_pad = jax.block_until_ready(out_pad)
    # TODO(synk): skip this slice if the consumer accepts 128-padded output lanes.
    out = out_pad[:, :out_size]

    ref = mlp_bn_reference(x, params)
    assert out.shape == (batch, out_size)
    assert jnp.allclose(out, ref, atol=2e-2, rtol=2e-2), "mismatch vs reference"

    print("KERNEL_OK")
</pallas_src>

<mosaic_0001>
module attributes {stable_mosaic.version = 11 : i64} {
  func.func @kernel(%arg0: memref<8x128xbf16, #tpu.memory_space<vmem>>, %arg1: memref<128x128xbf16, #tpu.memory_space<vmem>>, %arg2: memref<128x128xbf16, #tpu.memory_space<vmem>>, %arg3: memref<128x128xbf16, #tpu.memory_space<vmem>>, %arg4: memref<5x128xf32, #tpu.memory_space<vmem>>, %arg5: memref<8x128xf32, #tpu.memory_space<vmem>>) attributes {dimension_semantics = [], scalar_prefetch = 0 : i64, scratch_operands = 0 : i64, tpu.core_type = #tpu.core_type<tc>} {
    %c0 = arith.constant 0 : index
    %c0_0 = arith.constant 0 : index
    %0 = vector.load %arg4[%c0, %c0_0] : memref<5x128xf32, #tpu.memory_space<vmem>>, vector<5x128xf32>
    %c0_1 = arith.constant 0 : index
    %c0_2 = arith.constant 0 : index
    %1 = vector.load %arg0[%c0_1, %c0_2] : memref<8x128xbf16, #tpu.memory_space<vmem>>, vector<8x128xbf16>
    %c0_3 = arith.constant 0 : index
    %c0_4 = arith.constant 0 : index
    %2 = vector.load %arg1[%c0_3, %c0_4] : memref<128x128xbf16, #tpu.memory_space<vmem>>, vector<128x128xbf16>
    %cst = arith.constant dense<0.000000e+00> : vector<8x128xf32>
    %3 = tpu.matmul %1, %2, %cst {dimension_numbers = #tpu.dot_dimension_numbers<[1], [0], [0], [1], [0, 0, 1, 1], [], []>} : vector<8x128xbf16>, vector<128x128xbf16>, vector<8x128xf32> -> vector<8x128xf32>
    %cst_5 = arith.constant dense<0.000000e+00> : vector<128xf32>
    %4 = vector.multi_reduction <add>, %3, %cst_5 [0] : vector<8x128xf32> to vector<128xf32>
    %5 = vector.shape_cast %4 : vector<128xf32> to vector<1x128xf32>
    %6 = arith.mulf %3, %3 : vector<8x128xf32>
    %cst_6 = arith.constant dense<0.000000e+00> : vector<128xf32>
    %7 = vector.multi_reduction <add>, %6, %cst_6 [0] : vector<8x128xf32> to vector<128xf32>
    %8 = vector.shape_cast %7 : vector<128xf32> to vector<1x128xf32>
    %cst_7 = arith.constant 1.250000e-01 : f32
    %9 = vector.broadcast %cst_7 : f32 to vector<1x128xf32>
    %10 = arith.mulf %5, %9 : vector<1x128xf32>
    %cst_8 = arith.constant 1.250000e-01 : f32
    %11 = vector.broadcast %cst_8 : f32 to vector<1x128xf32>
    %12 = arith.mulf %8, %11 : vector<1x128xf32>
    %13 = arith.mulf %10, %10 : vector<1x128xf32>
    %14 = arith.subf %12, %13 : vector<1x128xf32>
    %cst_9 = arith.constant 0.000000e+00 : f32
    %15 = vector.broadcast %cst_9 : f32 to vector<1x128xf32>
    %16 = arith.maximumf %14, %15 : vector<1x128xf32>
    %17 = vector.extract_strided_slice %0 {offsets = [0, 0], sizes = [1, 128], strides = [1, 1]} : vector<5x128xf32> to vector<1x128xf32>
    %18 = vector.extract_strided_slice %0 {offsets = [1, 0], sizes = [1, 128], strides = [1, 1]} : vector<5x128xf32> to vector<1x128xf32>
    %cst_10 = arith.constant 9.99999974E-6 : f32
    %19 = vector.broadcast %cst_10 : f32 to vector<1x128xf32>
    %20 = arith.addf %16, %19 : vector<1x128xf32>
    %21 = math.rsqrt %20 : vector<1x128xf32>
    %22 = arith.mulf %17, %21 : vector<1x128xf32>
    %23 = arith.mulf %10, %22 : vector<1x128xf32>
    %24 = arith.subf %18, %23 : vector<1x128xf32>
    %25 = vector.broadcast %22 : vector<1x128xf32> to vector<8x128xf32>
    %26 = arith.mulf %3, %25 : vector<8x128xf32>
    %27 = vector.broadcast %24 : vector<1x128xf32> to vector<8x128xf32>
    %28 = arith.addf %26, %27 : vector<8x128xf32>
    %cst_11 = arith.constant 0.000000e+00 : f32
    %29 = vector.broadcast %cst_11 : f32 to vector<8x128xf32>
    %30 = arith.maximumf %28, %29 : vector<8x128xf32>
    %31 = arith.truncf %30 : vector<8x128xf32> to vector<8x128xbf16>
    %c0_12 = arith.constant 0 : index
    %c0_13 = arith.constant 0 : index
    %32 = vector.load %arg2[%c0_12, %c0_13] : memref<128x128xbf16, #tpu.memory_space<vmem>>, vector<128x128xbf16>
    %cst_14 = arith.constant dense<0.000000e+00> : vector<8x128xf32>
    %33 = tpu.matmul %31, %32, %cst_14 {dimension_numbers = #tpu.dot_dimension_numbers<[1], [0], [0], [1], [0, 0, 1, 1], [], []>} : vector<8x128xbf16>, vector<128x128xbf16>, vector<8x128xf32> -> vector<8x128xf32>
    %cst_15 = arith.constant dense<0.000000e+00> : vector<128xf32>
    %34 = vector.multi_reduction <add>, %33, %cst_15 [0] : vector<8x128xf32> to vector<128xf32>
    %35 = vector.shape_cast %34 : vector<128xf32> to vector<1x128xf32>
    %36 = arith.mulf %33, %33 : vector<8x128xf32>
    %cst_16 = arith.constant dense<0.000000e+00> : vector<128xf32>
    %37 = vector.multi_reduction <add>, %36, %cst_16 [0] : vector<8x128xf32> to vector<128xf32>
    %38 = vector.shape_cast %37 : vector<128xf32> to vector<1x128xf32>
    %cst_17 = arith.constant 1.250000e-01 : f32
    %39 = vector.broadcast %cst_17 : f32 to vector<1x128xf32>
    %40 = arith.mulf %35, %39 : vector<1x128xf32>
    %cst_18 = arith.constant 1.250000e-01 : f32
    %41 = vector.broadcast %cst_18 : f32 to vector<1x128xf32>
    %42 = arith.mulf %38, %41 : vector<1x128xf32>
    %43 = arith.mulf %40, %40 : vector<1x128xf32>
    %44 = arith.subf %42, %43 : vector<1x128xf32>
    %cst_19 = arith.constant 0.000000e+00 : f32
    %45 = vector.broadcast %cst_19 : f32 to vector<1x128xf32>
    %46 = arith.maximumf %44, %45 : vector<1x128xf32>
    %47 = vector.extract_strided_slice %0 {offsets = [2, 0], sizes = [1, 128], strides = [1, 1]} : vector<5x128xf32> to vector<1x128xf32>
    %48 = vector.extract_strided_slice %0 {offsets = [3, 0], sizes = [1, 128], strides = [1, 1]} : vector<5x128xf32> to vector<1x128xf32>
    %cst_20 = arith.constant 9.99999974E-6 : f32
    %49 = vector.broadcast %cst_20 : f32 to vector<1x128xf32>
    %50 = arith.addf %46, %49 : vector<1x128xf32>
    %51 = math.rsqrt %50 : vector<1x128xf32>
    %52 = arith.mulf %47, %51 : vector<1x128xf32>
    %53 = arith.mulf %40, %52 : vector<1x128xf32>
    %54 = arith.subf %48, %53 : vector<1x128xf32>
    %55 = vector.broadcast %52 : vector<1x128xf32> to vector<8x128xf32>
    %56 = arith.mulf %33, %55 : vector<8x128xf32>
    %57 = vector.broadcast %54 : vector<1x128xf32> to vector<8x128xf32>
    %58 = arith.addf %56, %57 : vector<8x128xf32>
    %cst_21 = arith.constant 0.000000e+00 : f32
    %59 = vector.broadcast %cst_21 : f32 to vector<8x128xf32>
    %60 = arith.maximumf %58, %59 : vector<8x128xf32>
    %61 = arith.truncf %60 : vector<8x128xf32> to vector<8x128xbf16>
    %c0_22 = arith.constant 0 : index
    %c0_23 = arith.constant 0 : index
    %62 = vector.load %arg3[%c0_22, %c0_23] : memref<128x128xbf16, #tpu.memory_space<vmem>>, vector<128x128xbf16>
    %63 = vector.extract_strided_slice %0 {offsets = [4, 0], sizes = [1, 128], strides = [1, 1]} : vector<5x128xf32> to vector<1x128xf32>
    %cst_24 = arith.constant dense<0.000000e+00> : vector<8x128xf32>
    %64 = tpu.matmul %61, %62, %cst_24 {dimension_numbers = #tpu.dot_dimension_numbers<[1], [0], [0], [1], [0, 0, 1, 1], [], []>} : vector<8x128xbf16>, vector<128x128xbf16>, vector<8x128xf32> -> vector<8x128xf32>
    %65 = vector.broadcast %63 : vector<1x128xf32> to vector<8x128xf32>
    %66 = arith.addf %64, %65 : vector<8x128xf32>
    %c0_25 = arith.constant 0 : index
    %c0_26 = arith.constant 0 : index
    %67 = vector.load %arg5[%c0_25, %c0_26] : memref<8x128xf32, #tpu.memory_space<vmem>>, vector<8x128xf32>
    tpu.vector_store %arg5[%c0_25, %c0_26], %66 {strides = array<i32>} : memref<8x128xf32, #tpu.memory_space<vmem>>, vector<8x128xf32>,
    return
  }
}

</mosaic_0001>

<llo_original>
// kernel: tpu_custom_call.1
$region0: #{tpu_custom_call.1}
  #allocation0 [shape = 'u32[]', space=smem, size = 0x4, offset = 0x4, fixed_abs, tag = 'smem constant byte address 0x4 - core index']
  #allocation1 [shape = 'u32[144,128]{1,0:T(1,128)}', space=vmem, size = 0x12000, scoped, tag = 'internal scratch']
  %s0 = inlined_call_operand.hbm [shape: bf16[8,128], index: 0, kind: input, shape index: {}]
  %s1 = inlined_call_operand.hbm [shape: bf16[128,128], index: 1, kind: input, shape index: {}]
  %s2 = inlined_call_operand.hbm [shape: bf16[128,128], index: 2, kind: input, shape index: {}]
  %s3 = inlined_call_operand.hbm [shape: bf16[128,128], index: 3, kind: input, shape index: {}]
  %s4 = inlined_call_operand.vmem [shape: f32[5,128], index: 4, kind: input, shape index: {}]
  %s5 = inlined_call_operand.hbm [shape: f32[8,128], index: 5, kind: output, shape index: {}]
  %s6 = sld [smem:[#allocation0]]
  $region46: #{tpu_custom_call.1} parent=0
    _
  %s8 = ssub.s32 1, %s6
  %s9 = scalar_select 0, %s8, %s6
  $region1: #{tpu_custom_call.1} parent=0
    #allocation2 [shape = 'u8[2048]{0}', space=vmem, size = 0x800, scoped, tag = 'input window, operand 0, single buffered']
    #allocation3 [shape = 's32[1]{0}', space=sflag, size = 0x4, scoped, tag = 'scoped memory for tpu_custom_call.1']
    #allocation4 [shape = 's32[1]{0}', space=sflag, size = 0x4, scoped, tag = 'scoped memory for tpu_custom_call.1']
    #allocation5 [shape = 'u8[32768]{0}', space=vmem, size = 0x8000, scoped, tag = 'input window, operand 1, single buffered']
    #allocation6 [shape = 's32[1]{0}', space=sflag, size = 0x4, scoped, tag = 'scoped memory for tpu_custom_call.1']
    #allocation7 [shape = 'u8[32768]{0}', space=vmem, size = 0x8000, scoped, tag = 'input window, operand 2, single buffered']
    #allocation8 [shape = 'u8[32768]{0}', space=vmem, size = 0x8000, scoped, tag = 'input window, operand 3, single buffered']
    #allocation9 [shape = 's32[1]{0}', space=sflag, size = 0x4, scoped, tag = 'scoped memory for tpu_custom_call.1']
    #allocation10 [shape = 'u8[4096]{0}', space=vmem, size = 0x1000, scoped, tag = 'output window, operand 0, single buffered']
    %10 = vsyncpa [#allocation3], 0
    %11 = vsyncpa [#allocation6], 0
    %12 = vsyncpa [#allocation9], 0
    %13 = vsyncpa [#allocation4], 0
    // Predicated region
    $region2: #{tpu_custom_call.1} parent=1 // pred_check
      _
    $region3: #{tpu_custom_call.1} parent=1 // pred_check_branch
      %15 = sbr.rel (0) target = $region5
    $region4: #{tpu_custom_call.1} parent=1 // pred_region
      %s17 = ssub.s32 64, 64
      %18 = vsyncadd [#allocation3], %s17
      %s20 = sshll.u32 [#allocation2], 4
      %s21 = int_to_ptr.vmem [resolvable:$true] %s20
      %23 = dma.hbm_to_vmem [thread:$0]  %s0, 64, %s21, [#allocation3]
    $region5: #{tpu_custom_call.1} parent=1 // pred_fallthru
      _
    // Predicated region
    $region6: #{tpu_custom_call.1} parent=1 // pred_check
      _
    $region7: #{tpu_custom_call.1} parent=1 // pred_check_branch
      %25 = sbr.rel (0) target = $region9
    $region8: #{tpu_custom_call.1} parent=1 // pred_region
      %s27 = ssub.s32 1024, 1024
      %28 = vsyncadd [#allocation6], %s27
      %s29 = sshll.u32 [#allocation5], 4
      %s30 = int_to_ptr.vmem [resolvable:$true] %s29
      %35 = dma.hbm_to_vmem [thread:$0]  %s1, 1024, %s30, [#allocation6], 64, 64, 4
    $region9: #{tpu_custom_call.1} parent=1 // pred_fallthru
      _
    // Predicated region
    $region10: #{tpu_custom_call.1} parent=1 // pred_check
      _
    $region11: #{tpu_custom_call.1} parent=1 // pred_check_branch
      %37 = sbr.rel (0) target = $region13
    $region12: #{tpu_custom_call.1} parent=1 // pred_region
      %s39 = ssub.s32 1024, 1024
      %40 = vsyncadd [#allocation6], %s39
      %s41 = sshll.u32 [#allocation7], 4
      %s42 = int_to_ptr.vmem [resolvable:$true] %s41
      %47 = dma.hbm_to_vmem [thread:$0]  %s2, 1024, %s42, [#allocation6], 64, 64, 4
    $region13: #{tpu_custom_call.1} parent=1 // pred_fallthru
      _
    // Predicated region
    $region14: #{tpu_custom_call.1} parent=1 // pred_check
      _
    $region15: #{tpu_custom_call.1} parent=1 // pred_check_branch
      %49 = sbr.rel (0) target = $region17
    $region16: #{tpu_custom_call.1} parent=1 // pred_region
      %s51 = ssub.s32 1024, 1024
      %52 = vsyncadd [#allocation9], %s51
      %s53 = sshll.u32 [#allocation8], 4
      %s54 = int_to_ptr.vmem [resolvable:$true] %s53
      %59 = dma.hbm_to_vmem [thread:$0]  %s3, 1024, %s54, [#allocation9], 64, 64, 4
    $region17: #{tpu_custom_call.1} parent=1 // pred_fallthru
      _
    // Predicated region
    $region18: #{tpu_custom_call.1} parent=1 // pred_check
      _
    $region19: #{tpu_custom_call.1} parent=1 // pred_check_branch
      %61 = sbr.rel (0) target = $region21
    $region20: #{tpu_custom_call.1} parent=1 // pred_region
      _
    $region21: #{tpu_custom_call.1} parent=1 // pred_fallthru
      _
    // Predicated region
    $region22: #{tpu_custom_call.1} parent=1 // pred_check
      _
    $region23: #{tpu_custom_call.1} parent=1 // pred_check_branch
      %63 = sbr.rel (0) target = $region25
    $region24: #{tpu_custom_call.1} parent=1 // pred_region
      %64 = dma.done [#allocation3], 64
    $region25: #{tpu_custom_call.1} parent=1 // pred_fallthru
      _
    // Predicated region
    $region26: #{tpu_custom_call.1} parent=1 // pred_check
      _
    $region27: #{tpu_custom_call.1} parent=1 // pred_check_branch
      %66 = sbr.rel (0) target = $region29
    $region28: #{tpu_custom_call.1} parent=1 // pred_region
      %67 = dma.done [#allocation6], 1024
    $region29: #{tpu_custom_call.1} parent=1 // pred_fallthru
      _
    // Predicated region
    $region30: #{tpu_custom_call.1} parent=1 // pred_check
      _
    $region31: #{tpu_custom_call.1} parent=1 // pred_check_branch
      %69 = sbr.rel (0) target = $region33
    $region32: #{tpu_custom_call.1} parent=1 // pred_region
      %70 = dma.done [#allocation6], 1024
    $region33: #{tpu_custom_call.1} parent=1 // pred_fallthru
      _
    // Predicated region
    $region34: #{tpu_custom_call.1} parent=1 // pred_check
      _
    $region35: #{tpu_custom_call.1} parent=1 // pred_check_branch
      %72 = sbr.rel (0) target = $region37
    $region36: #{tpu_custom_call.1} parent=1 // pred_region
      %73 = dma.done [#allocation9], 1024
    $region37: #{tpu_custom_call.1} parent=1 // pred_fallthru
      _
    %v75 = vld [vmem:[%s4] sm:$0x1f]
    %v76 = vld [vmem:[#allocation2] sm:$0xf]
    %v77 = vld [vmem:[#allocation5] sm:$0xf]
    %v78 = vld [vmem:[#allocation5 + $0x4] sm:$0xf]
    %v79 = vld [vmem:[#allocation5 + $0x8] sm:$0xf]
    %v80 = vld [vmem:[#allocation5 + $0xc] sm:$0xf]
    %v81 = vld [vmem:[#allocation5 + $0x10] sm:$0xf]
    %v82 = vld [vmem:[#allocation5 + $0x14] sm:$0xf]
    %v83 = vld [vmem:[#allocation5 + $0x18] sm:$0xf]
    %v84 = vld [vmem:[#allocation5 + $0x1c] sm:$0xf]
    %v85 = vld [vmem:[#allocation5 + $0x20] sm:$0xf]
    %v86 = vld [vmem:[#allocation5 + $0x24] sm:$0xf]
    %v87 = vld [vmem:[#allocation5 + $0x28] sm:$0xf]
    %v88 = vld [vmem:[#allocation5 + $0x2c] sm:$0xf]
    %v89 = vld [vmem:[#allocation5 + $0x30] sm:$0xf]
    %v90 = vld [vmem:[#allocation5 + $0x34] sm:$0xf]
    %v91 = vld [vmem:[#allocation5 + $0x38] sm:$0xf]
    %v92 = vld [vmem:[#allocation5 + $0x3c] sm:$0xf]
    %v109 = vunpack.c.l.b16 %v77
    %v110 = vunpack.c.l.b16 %v78
    %v111 = vunpack.c.l.b16 %v79
    %v112 = vunpack.c.l.b16 %v80
    %v113 = vunpack.c.l.b16 %v81
    %v114 = vunpack.c.l.b16 %v82
    %v115 = vunpack.c.l.b16 %v83
    %v116 = vunpack.c.l.b16 %v84
    %v117 = vunpack.c.l.b16 %v85
    %v118 = vunpack.c.l.b16 %v86
    %v119 = vunpack.c.l.b16 %v87
    %v120 = vunpack.c.l.b16 %v88
    %v121 = vunpack.c.l.b16 %v89
    %v122 = vunpack.c.l.b16 %v90
    %v123 = vunpack.c.l.b16 %v91
    %v124 = vunpack.c.l.b16 %v92
    %v125 = vpack.c.b16 %v110, %v109
    %v126 = vpack.c.b16 %v112, %v111
    %v127 = vpack.c.b16 %v114, %v113
    %v128 = vpack.c.b16 %v116, %v115
    %v129 = vpack.c.b16 %v118, %v117
    %v130 = vpack.c.b16 %v120, %v119
    %v131 = vpack.c.b16 %v122, %v121
    %v132 = vpack.c.b16 %v124, %v123
    %141 = vmatprep.subr.bf16.mxu0 0
    %142 = vmatpush1.bf16.msra.mxu0 %v125
    %143 = vmatprep.subr.bf16.mxu0 0
    %144 = vmatpush1.bf16.msra.mxu0 %v126
    %145 = vmatprep.subr.bf16.mxu0 0
    %146 = vmatpush1.bf16.msra.mxu0 %v127
    %147 = vmatprep.subr.bf16.mxu0 0
    %148 = vmatpush1.bf16.msra.mxu0 %v128
    %149 = vmatprep.subr.bf16.mxu0 0
    %150 = vmatpush1.bf16.msra.mxu0 %v129
    %151 = vmatprep.subr.bf16.mxu0 0
    %152 = vmatpush1.bf16.msra.mxu0 %v130
    %153 = vmatprep.subr.bf16.mxu0 0
    %154 = vmatpush1.bf16.msra.mxu0 %v131
    %155 = vmatprep.subr.bf16.mxu0 0
    %156 = vmatpush1.bf16.msra.mxu0 %v132
    %157 = vmatprep.subr.bf16.mxu0 0
    %158 = vmatpush1.bf16.msra.mxu0 0
    %159 = vmatprep.subr.bf16.mxu0 0
    %160 = vmatpush1.bf16.msra.mxu0 0
    %161 = vmatprep.subr.bf16.mxu0 0
    %162 = vmatpush1.bf16.msra.mxu0 0
    %163 = vmatprep.subr.bf16.mxu0 0
    %164 = vmatpush1.bf16.msra.mxu0 0
    %165 = vmatprep.subr.bf16.mxu0 0
    %166 = vmatpush1.bf16.msra.mxu0 0
    %167 = vmatprep.subr.bf16.mxu0 0
    %168 = vmatpush1.bf16.msra.mxu0 0
    %169 = vmatprep.subr.bf16.mxu0 0
    %170 = vmatpush1.bf16.msra.mxu0 0
    %171 = vmatprep.subr.bf16.mxu0 0
    %172 = vmatpush1.bf16.msra.mxu0 0
    %173 = vmatprep.mubr.bf16.mxu0 0
    %174 = vmatmul.mubr.bf16.gmra.mrb[0].mxu0 %v76
    %v175 = vpop.f32.mrb[0].mxu0
    %v176 = vadd.f32 0.0, %v175
    %v177 = vpop.f32.mrb[0].mxu0
    %v178 = vpop.f32.mrb[0].mxu0
    %v179 = vpop.f32.mrb[0].mxu0
    %180 = vdwg.mxu0
    %v181 = vrot.slane %v176, 4
    %v182 = vadd.f32 %v176, %v181
    %v183 = vrot.slane %v182, 2
    %v184 = vadd.f32 %v182, %v183
    %v185 = vrot.slane %v184, 1
    %v186 = vadd.f32 %v184, %v185
    %v187 = vmul.f32 %v176, %v176
    %v188 = vrot.slane %v187, 4
    %v189 = vadd.f32 %v187, %v188
    %v190 = vrot.slane %v189, 2
    %v191 = vadd.f32 %v189, %v190
    %v192 = vrot.slane %v191, 1
    %v193 = vadd.f32 %v191, %v192
    %v194 = vmul.f32 %v186, 0.125
    %v195 = vmul.f32 %v193, 0.125
    %v196 = vmul.f32 %v194, %v194
    %v197 = vsub.f32 %v195, %v196
    %v198 = vmax.f32 %v197, 0.0
    %v199 = vadd.f32 %v198, 1e-05
    %v200 = vrsqrt.pop %v199
    %v201 = vmul.f32 %v75, %v200
    %v202 = vmul.f32 %v194, %v201
    %v204 = vrot.slane %v202, 7
    %v206 = vsub.f32 %v75, %v204
    %v207 = vlaneseq
    %v208 = vshrl.u32 %v207, 7
    %v209 = vsub.s32 0, %v208
    %v210 = vrot.slane %v201, %v209
    %v211 = vmul.f32 %v176, %v210
    %v212 = vlaneseq
    %v213 = vshrl.u32 %v212, 7
    %v214 = vsub.s32 1, %v213
    %v215 = vrot.slane %v206, %v214
    %v216 = vadd.f32 %v211, %v215
    %v217 = vmax.f32 %v216, 0.0
    %v218 = vpack.c.bf16 %v217, %v217
    %v219 = vld [vmem:[#allocation7] sm:$0xf]
    %v220 = vld [vmem:[#allocation7 + $0x4] sm:$0xf]
    %v221 = vld [vmem:[#allocation7 + $0x8] sm:$0xf]
    %v222 = vld [vmem:[#allocation7 + $0xc] sm:$0xf]
    %v223 = vld [vmem:[#allocation7 + $0x10] sm:$0xf]
    %v224 = vld [vmem:[#allocation7 + $0x14] sm:$0xf]
    %v225 = vld [vmem:[#allocation7 + $0x18] sm:$0xf]
    %v226 = vld [vmem:[#allocation7 + $0x1c] sm:$0xf]
    %v227 = vld [vmem:[#allocation7 + $0x20] sm:$0xf]
    %v228 = vld [vmem:[#allocation7 + $0x24] sm:$0xf]
    %v229 = vld [vmem:[#allocation7 + $0x28] sm:$0xf]
    %v230 = vld [vmem:[#allocation7 + $0x2c] sm:$0xf]
    %v231 = vld [vmem:[#allocation7 + $0x30] sm:$0xf]
    %v232 = vld [vmem:[#allocation7 + $0x34] sm:$0xf]
    %v233 = vld [vmem:[#allocation7 + $0x38] sm:$0xf]
    %v234 = vld [vmem:[#allocation7 + $0x3c] sm:$0xf]
    %v251 = vunpack.c.l.b16 %v219
    %v252 = vunpack.c.l.b16 %v220
    %v253 = vunpack.c.l.b16 %v221
    %v254 = vunpack.c.l.b16 %v222
    %v255 = vunpack.c.l.b16 %v223
    %v256 = vunpack.c.l.b16 %v224
    %v257 = vunpack.c.l.b16 %v225
    %v258 = vunpack.c.l.b16 %v226
    %v259 = vunpack.c.l.b16 %v227
    %v260 = vunpack.c.l.b16 %v228
    %v261 = vunpack.c.l.b16 %v229
    %v262 = vunpack.c.l.b16 %v230
    %v263 = vunpack.c.l.b16 %v231
    %v264 = vunpack.c.l.b16 %v232
    %v265 = vunpack.c.l.b16 %v233
    %v266 = vunpack.c.l.b16 %v234
    %v267 = vpack.c.b16 %v252, %v251
    %v268 = vpack.c.b16 %v254, %v253
    %v269 = vpack.c.b16 %v256, %v255
    %v270 = vpack.c.b16 %v258, %v257
    %v271 = vpack.c.b16 %v260, %v259
    %v272 = vpack.c.b16 %v262, %v261
    %v273 = vpack.c.b16 %v264, %v263
    %v274 = vpack.c.b16 %v266, %v265
    %283 = vmatprep.subr.bf16.mxu0 0
    %284 = vmatpush1.bf16.msra.mxu0 %v267
    %285 = vmatprep.subr.bf16.mxu0 0
    %286 = vmatpush1.bf16.msra.mxu0 %v268
    %287 = vmatprep.subr.bf16.mxu0 0
    %288 = vmatpush1.bf16.msra.mxu0 %v269
    %289 = vmatprep.subr.bf16.mxu0 0
    %290 = vmatpush1.bf16.msra.mxu0 %v270
    %291 = vmatprep.subr.bf16.mxu0 0
    %292 = vmatpush1.bf16.msra.mxu0 %v271
    %293 = vmatprep.subr.bf16.mxu0 0
    %294 = vmatpush1.bf16.msra.mxu0 %v272
    %295 = vmatprep.subr.bf16.mxu0 0
    %296 = vmatpush1.bf16.msra.mxu0 %v273
    %297 = vmatprep.subr.bf16.mxu0 0
    %298 = vmatpush1.bf16.msra.mxu0 %v274
    %299 = vmatprep.subr.bf16.mxu0 0
    %300 = vmatpush1.bf16.msra.mxu0 0
    %301 = vmatprep.subr.bf16.mxu0 0
    %302 = vmatpush1.bf16.msra.mxu0 0
    %303 = vmatprep.subr.bf16.mxu0 0
    %304 = vmatpush1.bf16.msra.mxu0 0
    %305 = vmatprep.subr.bf16.mxu0 0
    %306 = vmatpush1.bf16.msra.mxu0 0
    %307 = vmatprep.subr.bf16.mxu0 0
    %308 = vmatpush1.bf16.msra.mxu0 0
    %309 = vmatprep.subr.bf16.mxu0 0
    %310 = vmatpush1.bf16.msra.mxu0 0
    %311 = vmatprep.subr.bf16.mxu0 0
    %312 = vmatpush1.bf16.msra.mxu0 0
    %313 = vmatprep.subr.bf16.mxu0 0
    %314 = vmatpush1.bf16.msra.mxu0 0
    %315 = vmatprep.mubr.bf16.mxu0 0
    %316 = vmatmul.mubr.bf16.gmra.mrb[0].mxu0 %v218
    %v317 = vpop.f32.mrb[0].mxu0
    %v318 = vadd.f32 0.0, %v317
    %v319 = vpop.f32.mrb[0].mxu0
    %v320 = vpop.f32.mrb[0].mxu0
    %v321 = vpop.f32.mrb[0].mxu0
    %322 = vdwg.mxu0
    %v323 = vrot.slane %v318, 4
    %v324 = vadd.f32 %v318, %v323
    %v325 = vrot.slane %v324, 2
    %v326 = vadd.f32 %v324, %v325
    %v327 = vrot.slane %v326, 1
    %v328 = vadd.f32 %v326, %v327
    %v329 = vmul.f32 %v318, %v318
    %v330 = vrot.slane %v329, 4
    %v331 = vadd.f32 %v329, %v330
    %v332 = vrot.slane %v331, 2
    %v333 = vadd.f32 %v331, %v332
    %v334 = vrot.slane %v333, 1
    %v335 = vadd.f32 %v333, %v334
    %v336 = vmul.f32 %v328, 0.125
    %v337 = vmul.f32 %v335, 0.125
    %v338 = vmul.f32 %v336, %v336
    %v339 = vsub.f32 %v337, %v338
    %v340 = vmax.f32 %v339, 0.0
    %v341 = vadd.f32 %v340, 1e-05
    %v342 = vrsqrt.pop %v341
    %v343 = vmul.f32 %v75, %v342
    %v344 = vmul.f32 %v336, %v343
    %v346 = vrot.slane %v344, 7
    %v348 = vsub.f32 %v75, %v346
    %v349 = vlaneseq
    %v350 = vshrl.u32 %v349, 7
    %v351 = vsub.s32 2, %v350
    %v352 = vrot.slane %v343, %v351
    %v353 = vmul.f32 %v318, %v352
    %v354 = vlaneseq
    %v355 = vshrl.u32 %v354, 7
    %v356 = vsub.s32 3, %v355
    %v357 = vrot.slane %v348, %v356
    %v358 = vadd.f32 %v353, %v357
    %v359 = vmax.f32 %v358, 0.0
    %v360 = vpack.c.bf16 %v359, %v359
    %v361 = vld [vmem:[#allocation8] sm:$0xf]
    %v362 = vld [vmem:[#allocation8 + $0x4] sm:$0xf]
    %v363 = vld [vmem:[#allocation8 + $0x8] sm:$0xf]
    %v364 = vld [vmem:[#allocation8 + $0xc] sm:$0xf]
    %v365 = vld [vmem:[#allocation8 + $0x10] sm:$0xf]
    %v366 = vld [vmem:[#allocation8 + $0x14] sm:$0xf]
    %v367 = vld [vmem:[#allocation8 + $0x18] sm:$0xf]
    %v368 = vld [vmem:[#allocation8 + $0x1c] sm:$0xf]
    %v369 = vld [vmem:[#allocation8 + $0x20] sm:$0xf]
    %v370 = vld [vmem:[#allocation8 + $0x24] sm:$0xf]
    %v371 = vld [vmem:[#allocation8 + $0x28] sm:$0xf]
    %v372 = vld [vmem:[#allocation8 + $0x2c] sm:$0xf]
    %v373 = vld [vmem:[#allocation8 + $0x30] sm:$0xf]
    %v374 = vld [vmem:[#allocation8 + $0x34] sm:$0xf]
    %v375 = vld [vmem:[#allocation8 + $0x38] sm:$0xf]
    %v376 = vld [vmem:[#allocation8 + $0x3c] sm:$0xf]
    %v377 = vlaneseq
    %v378 = vshrl.u32 %v377, 7
    %v379 = vsub.s32 4, %v378
    %v380 = vrot.slane %v75, %v379
    %v397 = vunpack.c.l.b16 %v361
    %v398 = vunpack.c.l.b16 %v362
    %v399 = vunpack.c.l.b16 %v363
    %v400 = vunpack.c.l.b16 %v364
    %v401 = vunpack.c.l.b16 %v365
    %v402 = vunpack.c.l.b16 %v366
    %v403 = vunpack.c.l.b16 %v367
    %v404 = vunpack.c.l.b16 %v368
    %v405 = vunpack.c.l.b16 %v369
    %v406 = vunpack.c.l.b16 %v370
    %v407 = vunpack.c.l.b16 %v371
    %v408 = vunpack.c.l.b16 %v372
    %v409 = vunpack.c.l.b16 %v373
    %v410 = vunpack.c.l.b16 %v374
    %v411 = vunpack.c.l.b16 %v375
    %v412 = vunpack.c.l.b16 %v376
    %v413 = vpack.c.b16 %v398, %v397
    %v414 = vpack.c.b16 %v400, %v399
    %v415 = vpack.c.b16 %v402, %v401
    %v416 = vpack.c.b16 %v404, %v403
    %v417 = vpack.c.b16 %v406, %v405
    %v418 = vpack.c.b16 %v408, %v407
    %v419 = vpack.c.b16 %v410, %v409
    %v420 = vpack.c.b16 %v412, %v411
    %429 = vmatprep.subr.bf16.mxu0 0
    %430 = vmatpush1.bf16.msra.mxu0 %v413
    %431 = vmatprep.subr.bf16.mxu0 0
    %432 = vmatpush1.bf16.msra.mxu0 %v414
    %433 = vmatprep.subr.bf16.mxu0 0
    %434 = vmatpush1.bf16.msra.mxu0 %v415
    %435 = vmatprep.subr.bf16.mxu0 0
    %436 = vmatpush1.bf16.msra.mxu0 %v416
    %437 = vmatprep.subr.bf16.mxu0 0
    %438 = vmatpush1.bf16.msra.mxu0 %v417
    %439 = vmatprep.subr.bf16.mxu0 0
    %440 = vmatpush1.bf16.msra.mxu0 %v418
    %441 = vmatprep.subr.bf16.mxu0 0
    %442 = vmatpush1.bf16.msra.mxu0 %v419
    %443 = vmatprep.subr.bf16.mxu0 0
    %444 = vmatpush1.bf16.msra.mxu0 %v420
    %445 = vmatprep.subr.bf16.mxu0 0
    %446 = vmatpush1.bf16.msra.mxu0 0
    %447 = vmatprep.subr.bf16.mxu0 0
    %448 = vmatpush1.bf16.msra.mxu0 0
    %449 = vmatprep.subr.bf16.mxu0 0
    %450 = vmatpush1.bf16.msra.mxu0 0
    %451 = vmatprep.subr.bf16.mxu0 0
    %452 = vmatpush1.bf16.msra.mxu0 0
    %453 = vmatprep.subr.bf16.mxu0 0
    %454 = vmatpush1.bf16.msra.mxu0 0
    %455 = vmatprep.subr.bf16.mxu0 0
    %456 = vmatpush1.bf16.msra.mxu0 0
    %457 = vmatprep.subr.bf16.mxu0 0
    %458 = vmatpush1.bf16.msra.mxu0 0
    %459 = vmatprep.subr.bf16.mxu0 0
    %460 = vmatpush1.bf16.msra.mxu0 0
    %461 = vmatprep.mubr.bf16.mxu0 0
    %462 = vmatmul.mubr.bf16.gmra.mrb[0].mxu0 %v360
    %v463 = vpop.f32.mrb[0].mxu0
    %v464 = vadd.f32 %v380, %v463
    %v465 = vpop.f32.mrb[0].mxu0
    %v466 = vpop.f32.mrb[0].mxu0
    %v467 = vpop.f32.mrb[0].mxu0
    %468 = vdwg.mxu0
    %469 = vst [vmem:[#allocation10] sm:$0xff] %v464
    // Predicated region
    $region38: #{tpu_custom_call.1} parent=1 // pred_check
      _
    $region39: #{tpu_custom_call.1} parent=1 // pred_check_branch
      %471 = sbr.rel (0) target = $region41
    $region40: #{tpu_custom_call.1} parent=1 // pred_region
      %s473 = ssub.s32 128, 128
      %474 = vsyncadd [#allocation4], %s473
      %s476 = sshll.u32 [#allocation10], 4
      %s477 = int_to_ptr.vmem [resolvable:$true] %s476
      %479 = dma.vmem_to_hbm [thread:$0]  %s477, 128, %s5, [#allocation4]
    $region41: #{tpu_custom_call.1} parent=1 // pred_fallthru
      _
    // Predicated region
    $region42: #{tpu_custom_call.1} parent=1 // pred_check
      _
    $region43: #{tpu_custom_call.1} parent=1 // pred_check_branch
      %481 = sbr.rel (0) target = $region45
    $region44: #{tpu_custom_call.1} parent=1 // pred_region
      %482 = dma.done [#allocation4], 128
    $region45: #{tpu_custom_call.1} parent=1 // pred_fallthru
      _
    %483 = vsyncpa [#allocation3], 1
    %484 = vsyncpa [#allocation6], 1
    %485 = vsyncpa [#allocation9], 1
    %486 = vsyncpa [#allocation4], 1

</llo_original>
